<compile_context>
chip_gen: v7x
topology: tpu7x:2x2x1
jax: 0.10.0
libtpu: 0.0.40
codegen_flags: <defaults>
</compile_context>

<pallas_src>
import math
from functools import partial

import jax
import jax.numpy as jnp
from jax import lax
from jax.experimental import pallas as pl
from jax.experimental.pallas import tpu as pltpu


def _critic_kernel(state_ref, w1_ref, wout_ref, o_ref, *, state_dim, num_heads):
    # state_ref : VMEM (tB, D+1) f32  rows of [features..., epoch_index]
    # w1_ref    : VMEM (D+1, H) f32   fc1 weight^T with fc1 bias as last row
    # wout_ref  : VMEM (H+1, m) f32   all head weights (columns) + biases (last row)
    # o_ref     : VMEM (tB, 1)  f32   per-row value
    D = state_dim
    m = num_heads
    H = w1_ref.shape[1]

    s = state_ref[...]                                            # (tB, D+1)
    tb = s.shape[0]

    # per-row epoch index from the last column: truncate like int(), clamp for safety
    epoch = jnp.clip(s[:, D:D + 1].astype(jnp.int32), 0, m - 1)   # (tB, 1)

    # overwrite the epoch slot with 1.0 so the bias row of w1_aug applies
    col = lax.broadcasted_iota(jnp.int32, s.shape, 1)
    x_aug = jnp.where(col == D, 1.0, s)                           # (tB, D+1)

    # fc1 + ReLU (MXU matmul, f32 accumulation)
    h = jnp.maximum(
        jnp.dot(x_aug, w1_ref[...], preferred_element_type=jnp.float32), 0.0)  # (tB, H)

    # all m heads at once; head biases are the last row of wout_aug
    all_vals = (jnp.dot(h, wout_ref[:H, :], preferred_element_type=jnp.float32)
                + wout_ref[H:H + 1, :])                           # (tB, m)

    # select each row's head with a one-hot mask (m is tiny -> cheap VPU reduce)
    onehot = lax.broadcasted_iota(jnp.int32, (tb, m), 1) == epoch  # (tB, m) bool
    value = jnp.sum(jnp.where(onehot, all_vals, 0.0), axis=-1, keepdims=True)
    o_ref[...] = value.astype(o_ref.dtype)


@partial(jax.jit, static_argnames=("tile_b",))
def critic_forward(states, w1_aug, wout_aug, *, tile_b=128):
    """Batched critic forward.

    states  : (B, state_dim+1) f32, last column carries the (float) epoch index.
    w1_aug  : (state_dim+1, H) f32  = [fc1.weight^T ; fc1.bias]
    wout_aug: (H+1, m) f32          = [head weights (H, m) ; head biases (m,)]
    Returns (B, 1) f32 values (reward_dim = 1 per row, like the PyTorch module).
    """
    B, Dp1 = states.shape
    D = Dp1 - 1
    H = w1_aug.shape[1]
    m = wout_aug.shape[1]

    tb = min(tile_b, B)
    b_pad = pl.cdiv(B, tb) * tb
    x = states
    if b_pad != B:
        x = jnp.pad(states, ((0, b_pad - B), (0, 0)))

    out = pl.pallas_call(
        partial(_critic_kernel, state_dim=D, num_heads=m),
        out_shape=jax.ShapeDtypeStruct((b_pad, 1), jnp.float32),
        grid=(b_pad // tb,),
        in_specs=[
            pl.BlockSpec((tb, Dp1), lambda i: (i, 0)),      # state tile
            pl.BlockSpec((D + 1, H), lambda i: (0, 0)),     # fc1 weight+bias (resident)
            pl.BlockSpec((H + 1, m), lambda i: (0, 0)),     # all heads weight+bias (resident)
        ],
        out_specs=pl.BlockSpec((tb, 1), lambda i: (i, 0)),
        compiler_params=pltpu.CompilerParams(
            dimension_semantics=("parallel",)),
    )(x, w1_aug, wout_aug)

    if b_pad != B:
        out = out[:B]
    return out


def critic_forward_single(state, w1_aug, wout_aug):
    """Per-sample interface identical to PyTorch Critic.forward(state) -> (1,)."""
    return critic_forward(state[None, :], w1_aug, wout_aug)[0]


def init_params(key, num_pools, num_epochs_per_day):
    """Deterministic init matching reset_parameters(): fc1 kaiming_normal_
    (relu) weights, zero fc1 bias; output heads keep nn.Linear's default
    uniform(-1/sqrt(fan_in), 1/sqrt(fan_in)). Returned kernel-ready with the
    biases folded into the weight matrices."""
    state_dim = 2 * num_pools
    hidden = 34
    m = num_epochs_per_day
    k1, k2, k3 = jax.random.split(key, 3)
    w1 = jax.random.normal(k1, (hidden, state_dim), jnp.float32) * math.sqrt(2.0 / state_dim)
    b1 = jnp.zeros((hidden,), jnp.float32)
    bound = 1.0 / math.sqrt(hidden)
    w_heads = jax.random.uniform(k2, (m, hidden), jnp.float32, -bound, bound)
    b_heads = jax.random.uniform(k3, (m,), jnp.float32, -bound, bound)
    w1_aug = jnp.concatenate([w1.T, b1[None, :]], axis=0)            # (D+1, H)
    wout_aug = jnp.concatenate([w_heads.T, b_heads[None, :]], axis=0)  # (H+1, m)
    return w1_aug, wout_aug


if __name__ == "__main__":
    num_pools = 16                # state_dim = 32
    num_epochs_per_day = 4        # m output heads
    state_dim = 2 * num_pools
    hidden = 34
    batch = 256

    key = jax.random.PRNGKey(0)
    kp, kf, ke = jax.random.split(key, 3)
    w1_aug, wout_aug = init_params(kp, num_pools, num_epochs_per_day)

    # states = [features..., epoch_index]; last column carries the head index.
    feats = jax.random.normal(kf, (batch, state_dim), jnp.float32)
    epochs = jax.random.randint(ke, (batch,), 0, num_epochs_per_day)
    states = jnp.concatenate([feats, epochs.astype(jnp.float32)[:, None]], axis=1)

    # TODO(synk): the PyTorch forward's torch.isnan(...).any() host-side debug
    # print has no effect on the returned value and is omitted.
    values = jax.block_until_ready(critic_forward(states, w1_aug, wout_aug))
    assert values.shape == (batch, 1)

    # plain-JAX reference (per-row PyTorch semantics)
    w1t, b1 = w1_aug[:state_dim], w1_aug[state_dim]
    wh, bh = wout_aug[:hidden], wout_aug[hidden]
    h_ref = jnp.maximum(feats @ w1t + b1, 0.0)
    ref = jnp.take_along_axis(h_ref @ wh + bh, epochs[:, None], axis=1)
    assert jnp.allclose(values, ref, atol=1e-5, rtol=1e-5), "batched mismatch vs reference"

    # single-sample path, matching the original module's forward(state) -> (1,)
    one = jax.block_until_ready(critic_forward_single(states[3], w1_aug, wout_aug))
    assert one.shape == (1,)
    assert jnp.allclose(one, ref[3], atol=1e-5, rtol=1e-5), "single-sample mismatch"

    print("KERNEL_OK")
</pallas_src>

<mosaic_0001>
module attributes {stable_mosaic.version = 11 : i64} {
  func.func @_critic_kernel(%arg0: i32, %arg1: memref<128x33xf32, #tpu.memory_space<vmem>>, %arg2: memref<33x34xf32, #tpu.memory_space<vmem>>, %arg3: memref<35x4xf32, #tpu.memory_space<vmem>>, %arg4: memref<128x1xf32, #tpu.memory_space<vmem>>) attributes {dimension_semantics = [#tpu.dimension_semantics<parallel>], iteration_bounds = array<i64: 2>, scalar_prefetch = 0 : i64, scratch_operands = 0 : i64, tpu.core_type = #tpu.core_type<tc>, window_params = [{transform_indices = @transform_0, window_bounds = array<i64: 128, 33>}, {pipeline_mode = #tpu.pipeline_mode<synchronous>, transform_indices = @transform_1, window_bounds = array<i64: 33, 34>}, {pipeline_mode = #tpu.pipeline_mode<synchronous>, transform_indices = @transform_2, window_bounds = array<i64: 35, 4>}, {transform_indices = @transform_3, window_bounds = array<i64: 128, 1>}]} {
    %c0 = arith.constant 0 : index
    %c0_0 = arith.constant 0 : index
    %0 = vector.load %arg1[%c0, %c0_0] : memref<128x33xf32, #tpu.memory_space<vmem>>, vector<128x33xf32>
    %1 = vector.extract_strided_slice %0 {offsets = [0, 32], sizes = [128, 1], strides = [1, 1]} : vector<128x33xf32> to vector<128x1xf32>
    %2 = arith.fptosi %1 : vector<128x1xf32> to vector<128x1xi32>
    %c0_i32 = arith.constant 0 : i32
    %c3_i32 = arith.constant 3 : i32
    %3 = vector.broadcast %c0_i32 : i32 to vector<128x1xi32>
    %4 = arith.maxsi %3, %2 : vector<128x1xi32>
    %5 = vector.broadcast %c3_i32 : i32 to vector<128x1xi32>
    %6 = arith.minsi %5, %4 : vector<128x1xi32>
    %7 = tpu.iota {dimensions = array<i32: 1>} : vector<128x33xi32>
    %c32_i32 = arith.constant 32 : i32
    %8 = vector.broadcast %c32_i32 : i32 to vector<128x33xi32>
    %9 = arith.cmpi eq, %7, %8 : vector<128x33xi32>
    %cst = arith.constant 1.000000e+00 : f32
    %10 = vector.broadcast %cst : f32 to vector<128x33xf32>
    %11 = arith.select %9, %10, %0 : vector<128x33xi1>, vector<128x33xf32>
    %c0_1 = arith.constant 0 : index
    %c0_2 = arith.constant 0 : index
    %12 = vector.load %arg2[%c0_1, %c0_2] : memref<33x34xf32, #tpu.memory_space<vmem>>, vector<33x34xf32>
    %cst_3 = arith.constant dense<0.000000e+00> : vector<128x34xf32>
    %13 = tpu.matmul %11, %12, %cst_3 {dimension_numbers = #tpu.dot_dimension_numbers<[1], [0], [0], [1], [0, 0, 1, 1], [], []>} : vector<128x33xf32>, vector<33x34xf32>, vector<128x34xf32> -> vector<128x34xf32>
    %cst_4 = arith.constant 0.000000e+00 : f32
    %14 = vector.broadcast %cst_4 : f32 to vector<128x34xf32>
    %15 = arith.maximumf %13, %14 : vector<128x34xf32>
    %c0_5 = arith.constant 0 : index
    %c0_6 = arith.constant 0 : index
    %16 = vector.load %arg3[%c0_5, %c0_6] : memref<35x4xf32, #tpu.memory_space<vmem>>, vector<34x4xf32>
    %cst_7 = arith.constant dense<0.000000e+00> : vector<128x4xf32>
    %17 = tpu.matmul %15, %16, %cst_7 {dimension_numbers = #tpu.dot_dimension_numbers<[1], [0], [0], [1], [0, 0, 1, 1], [], []>} : vector<128x34xf32>, vector<34x4xf32>, vector<128x4xf32> -> vector<128x4xf32>
    %c34 = arith.constant 34 : index
    %c0_8 = arith.constant 0 : index
    %18 = vector.load %arg3[%c34, %c0_8] : memref<35x4xf32, #tpu.memory_space<vmem>>, vector<1x4xf32>
    %19 = vector.broadcast %18 : vector<1x4xf32> to vector<128x4xf32>
    %20 = arith.addf %17, %19 : vector<128x4xf32>
    %21 = tpu.iota {dimensions = array<i32: 1>} : vector<128x4xi32>
    %22 = vector.broadcast %6 : vector<128x1xi32> to vector<128x4xi32>
    %23 = arith.cmpi eq, %21, %22 : vector<128x4xi32>
    %cst_9 = arith.constant 0.000000e+00 : f32
    %24 = vector.broadcast %cst_9 : f32 to vector<128x4xf32>
    %25 = arith.select %23, %20, %24 : vector<128x4xi1>, vector<128x4xf32>
    %cst_10 = arith.constant dense<0.000000e+00> : vector<128xf32>
    %26 = vector.multi_reduction <add>, %25, %cst_10 [1] : vector<128x4xf32> to vector<128xf32>
    %27 = vector.shape_cast %26 : vector<128xf32> to vector<128x1xf32>
    %c0_11 = arith.constant 0 : index
    %c0_12 = arith.constant 0 : index
    %28 = vector.load %arg4[%c0_11, %c0_12] : memref<128x1xf32, #tpu.memory_space<vmem>>, vector<128x1xf32>
    tpu.vector_store %arg4[%c0_11, %c0_12], %27 {strides = array<i32>} : memref<128x1xf32, #tpu.memory_space<vmem>>, vector<128x1xf32>,
    return
  }
  func.func @transform_0(%arg0: i32) -> (i32, i32) {
    %c0_i32 = arith.constant 0 : i32
    %c0_i32_0 = arith.constant 0 : i32
    return %arg0, %c0_i32 : i32, i32
  }
  func.func @transform_1(%arg0: i32) -> (i32, i32) {
    %c0_i32 = arith.constant 0 : i32
    %c0_i32_0 = arith.constant 0 : i32
    %c0_i32_1 = arith.constant 0 : i32
    return %c0_i32, %c0_i32_0 : i32, i32
  }
  func.func @transform_2(%arg0: i32) -> (i32, i32) {
    %c0_i32 = arith.constant 0 : i32
    %c0_i32_0 = arith.constant 0 : i32
    %c0_i32_1 = arith.constant 0 : i32
    return %c0_i32, %c0_i32_0 : i32, i32
  }
  func.func @transform_3(%arg0: i32) -> (i32, i32) {
    %c0_i32 = arith.constant 0 : i32
    %c0_i32_0 = arith.constant 0 : i32
    return %arg0, %c0_i32 : i32, i32
  }
}

</mosaic_0001>

<llo_original>
// kernel: critic_forward.1
$region0: #{critic_forward.1}
  #allocation0 [shape = 'u32[]', space=smem, size = 0x4, offset = 0x4, fixed_abs, tag = 'smem constant byte address 0x4 - core index']
  #allocation1 [shape = 'u32[144,128]{1,0:T(1,128)}', space=vmem, size = 0x12000, scoped, tag = 'internal scratch']
  %s0 = inlined_call_operand.vmem [shape: f32[256,33], index: 0, kind: input, shape index: {}]
  %s1 = inlined_call_operand.vmem [shape: f32[33,34], index: 1, kind: input, shape index: {}]
  %s2 = inlined_call_operand.vmem [shape: f32[35,4], index: 2, kind: input, shape index: {}]
  %s3 = inlined_call_operand.vmem [shape: f32[256,1], index: 3, kind: output, shape index: {}]
  %s4 = sld [smem:[#allocation0]]
  $region45: #{critic_forward.1} parent=0
    _
  %s6 = ssub.s32 1, %s4
  %s7 = scalar_select 0, %s6, %s4
  loop: start=0, step=1, limit=4
  $region2: #{critic_forward.1} parent=0 // loop_pre_header
    _
  $region3: #{critic_forward.1} parent=0 // loop_header
    %s9 = sphi 0, %s13
    %p10 = scmp.ge.s32.totalorder %s9, 4
    %s19 = sphi 0, %s21
    %s22 = sphi 0, %s19
    %s23 = sphi 0, %s22
    %s39 = sphi 0, %s23
    %s43 = sphi 0, %s43
    %s45 = sphi 0, %s43
    %s46 = sphi 0, %s45
    %s60 = sphi 0, %s46
    %s64 = sphi 0, %s64
    %s66 = sphi 0, %s64
    %s67 = sphi 0, %s66
    %s81 = sphi 0, %s67
    %s87 = sphi 0, %s89
    %s90 = sphi 0, %s87
    %s91 = sphi 0, %s90
    %s107 = sphi 0, %s91
  $region4: #{critic_forward.1} parent=0 // loop_header_branch
    %12 = sbr.rel (%p10) target = $region8
  $region5: #{critic_forward.1} parent=0 // loop_body
    %s14 = ssub.s32 %s9, 1
    %s15 = ssub.s32 %s9, 2
    %s16 = sadd.s32 %s9, 1
    %s17 = ssub.s32 %s9, %s16
    %p18 = scmp.eq.s32.totalorder %s17, 0
    %s20 = sadd.s32 %s19, 1
    %s21 = scalar_select %p18, %s19, %s20
    %p24 = pneg %p18
    %p25 = scmp.eq.s32.totalorder %s9, 1
    %p26 = por %p24, %p25
    %p27 = scmp.ne.s32.totalorder %s19, %s22
    %p28 = scmp.eq.s32.totalorder %s9, 0
    %p29 = por %p27, %p28
    %p30 = scmp.ne.s32.totalorder %s19, %s22
    %p31 = scmp.eq.s32.totalorder %s14, 1
    %p32 = por %p30, %p31
    %p33 = scmp.ne.s32.totalorder %s22, %s23
    %p34 = scmp.eq.s32.totalorder %s14, 0
    %p35 = por %p33, %p34
    %p36 = scmp.ne.s32.totalorder %s22, %s23
    %p37 = scmp.eq.s32.totalorder %s15, 1
    %p38 = por %p36, %p37
    %p40 = scmp.ne.s32.totalorder %s23, %s39
    %p41 = scmp.eq.s32.totalorder %s15, 0
    %p42 = por %p40, %p41
    %s44 = sadd.s32 %s43, 1
    %p47 = scmp.eq.s32.totalorder %s9, 1
    %p48 = scmp.ne.s32.totalorder %s43, %s45
    %p49 = scmp.eq.s32.totalorder %s9, 0
    %p50 = por %p48, %p49
    %p51 = scmp.ne.s32.totalorder %s43, %s45
    %p52 = scmp.eq.s32.totalorder %s14, 1
    %p53 = por %p51, %p52
    %p54 = scmp.ne.s32.totalorder %s45, %s46
    %p55 = scmp.eq.s32.totalorder %s14, 0
    %p56 = por %p54, %p55
    %p57 = scmp.ne.s32.totalorder %s45, %s46
    %p58 = scmp.eq.s32.totalorder %s15, 1
    %p59 = por %p57, %p58
    %p61 = scmp.ne.s32.totalorder %s46, %s60
    %p62 = scmp.eq.s32.totalorder %s15, 0
    %p63 = por %p61, %p62
    %s65 = sadd.s32 %s64, 1
    %p68 = scmp.eq.s32.totalorder %s9, 1
    %p69 = scmp.ne.s32.totalorder %s64, %s66
    %p70 = scmp.eq.s32.totalorder %s9, 0
    %p71 = por %p69, %p70
    %p72 = scmp.ne.s32.totalorder %s64, %s66
    %p73 = scmp.eq.s32.totalorder %s14, 1
    %p74 = por %p72, %p73
    %p75 = scmp.ne.s32.totalorder %s66, %s67
    %p76 = scmp.eq.s32.totalorder %s14, 0
    %p77 = por %p75, %p76
    %p78 = scmp.ne.s32.totalorder %s66, %s67
    %p79 = scmp.eq.s32.totalorder %s15, 1
    %p80 = por %p78, %p79
    %p82 = scmp.ne.s32.totalorder %s67, %s81
    %p83 = scmp.eq.s32.totalorder %s15, 0
    %p84 = por %p82, %p83
    %s85 = ssub.s32 %s9, %s16
    %p86 = scmp.eq.s32.totalorder %s85, 0
    %s88 = sadd.s32 %s87, 1
    %s89 = scalar_select %p86, %s87, %s88
    %p92 = pneg %p86
    %p93 = scmp.eq.s32.totalorder %s9, 1
    %p94 = por %p92, %p93
    %p95 = scmp.ne.s32.totalorder %s87, %s90
    %p96 = scmp.eq.s32.totalorder %s9, 0
    %p97 = por %p95, %p96
    %p98 = scmp.ne.s32.totalorder %s87, %s90
    %p99 = scmp.eq.s32.totalorder %s14, 1
    %p100 = por %p98, %p99
    %p101 = scmp.ne.s32.totalorder %s90, %s91
    %p102 = scmp.eq.s32.totalorder %s14, 0
    %p103 = por %p101, %p102
    %p104 = scmp.ne.s32.totalorder %s90, %s91
    %p105 = scmp.eq.s32.totalorder %s15, 1
    %p106 = por %p104, %p105
    %p108 = scmp.ne.s32.totalorder %s91, %s107
    %p109 = scmp.eq.s32.totalorder %s15, 0
    %p110 = por %p108, %p109
    %p111 = scmp.le.s32.totalorder 1, %s9
    %p112 = scmp.lt.s32.totalorder %s9, 3
    %p113 = pnand %p111, %p112
    %p114 = pneg %p113
    // Predicated region
    $region9: #{critic_forward.1} parent=5 // pred_check
      _
    $region10: #{critic_forward.1} parent=5 // pred_check_branch
      %116 = sbr.rel (%p113) target = $region12
    $region11: #{critic_forward.1} parent=5 // pred_region
      %s117 = ssub.s32 %s9, 1
      // Predicated region
      $region13: #{critic_forward.1} parent=11 // pred_check
        %p118 = pneg %p56
      $region14: #{critic_forward.1} parent=11 // pred_check_branch
        %120 = sbr.rel (%p118) target = $region16
      $region15: #{critic_forward.1} parent=11 // pred_region
        _
      $region16: #{critic_forward.1} parent=11 // pred_fallthru
        _
      // Predicated region
      $region17: #{critic_forward.1} parent=11 // pred_check
        %p121 = pneg %p77
      $region18: #{critic_forward.1} parent=11 // pred_check_branch
        %123 = sbr.rel (%p121) target = $region20
      $region19: #{critic_forward.1} parent=11 // pred_region
        _
      $region20: #{critic_forward.1} parent=11 // pred_fallthru
        _
    $region12: #{critic_forward.1} parent=5 // pred_fallthru
      _
    %p124 = scmp.lt.s32.totalorder %s9, 2
    // Predicated region
    $region21: #{critic_forward.1} parent=5 // pred_check
      %p125 = pneg %p124
    $region22: #{critic_forward.1} parent=5 // pred_check_branch
      %127 = sbr.rel (%p125) target = $region24
    $region23: #{critic_forward.1} parent=5 // pred_region
      // Predicated region
      $region25: #{critic_forward.1} parent=23 // pred_check
        %p128 = pneg %p29
      $region26: #{critic_forward.1} parent=23 // pred_check_branch
        %130 = sbr.rel (%p128) target = $region28
      $region27: #{critic_forward.1} parent=23 // pred_region
        %s131 = smul.u32 16, %s9
        %p132 = scmp.lt.s32.totalorder %s131, 31
        %s133 = scalar_select %p132, %s131, 31
        %s134 = smul.addr %s133, 8
        %s135 = scalar_lea.vmem %s0, %s134
        %s136 = smul.u32 16, %s9
      $region28: #{critic_forward.1} parent=23 // pred_fallthru
        _
    $region24: #{critic_forward.1} parent=5 // pred_fallthru
      _
    %p137 = scmp.le.s32.totalorder 1, %s9
    %p138 = scmp.lt.s32.totalorder %s9, 3
    %p139 = pnand %p137, %p138
    %p140 = pneg %p139
    // Predicated region
    $region29: #{critic_forward.1} parent=5 // pred_check
      _
    $region30: #{critic_forward.1} parent=5 // pred_check_branch
      %142 = sbr.rel (%p139) target = $region32
    $region31: #{critic_forward.1} parent=5 // pred_region
      %s143 = ssub.s32 %s9, 1
      %s144 = smul.u32 16, %s14
      %p145 = scmp.lt.s32.totalorder %s144, 31
      %s146 = scalar_select %p145, %s144, 31
      %s147 = smul.addr %s146, 8
      %s148 = scalar_lea.vmem %s0, %s147
      %p149 = pneg %p35
      %p150 = pneg %p32
      %p151 = pneg %p56
      %p152 = pneg %p53
      %p153 = pneg %p77
      %p154 = pneg %p74
      %p155 = pneg %p103
      %p156 = pneg %p100
      %s157 = smul.u32 16, %s14
      %p158 = scmp.lt.s32.totalorder %s157, 31
      %s159 = scalar_select %p158, %s157, 31
      %s160 = smul.addr %s159, 8
      %s161 = scalar_lea.vmem %s3, %s160
      %s162 = smul.u32 16, %s14
      %p163 = scmp.lt.s32.totalorder %s162, 31
      %s164 = scalar_select %p163, %s162, 31
      %s165 = smul.addr %s164, 8
      %s166 = scalar_lea.vmem %s0, %s165
      %s167 = smul.u32 16, %s14
      %s168 = smul.u32 16, %s14
      %p169 = scmp.lt.s32.totalorder %s168, 31
      %s170 = scalar_select %p169, %s168, 31
      %s171 = smul.addr %s170, 8
      %s172 = scalar_lea.vmem %s3, %s171
      %s173 = smul.u32 16, %s14
      %v174 = vld [vmem:[%s166] sm:$0xff]
      %v175 = vld [vmem:[%s166 + $0x8] sm:$0xff]
      %v176 = vld [vmem:[%s166 + $0x10] sm:$0xff]
      %v177 = vld [vmem:[%s166 + $0x18] sm:$0xff]
      %v178 = vld [vmem:[%s166 + $0x20] sm:$0xff]
      %v179 = vld [vmem:[%s166 + $0x28] sm:$0xff]
      %v180 = vld [vmem:[%s166 + $0x30] sm:$0xff]
      %v181 = vld [vmem:[%s166 + $0x38] sm:$0xff]
      %v182 = vld [vmem:[%s166 + $0x40] sm:$0xff]
      %v183 = vld [vmem:[%s166 + $0x48] sm:$0xff]
      %v184 = vld [vmem:[%s166 + $0x50] sm:$0xff]
      %v185 = vld [vmem:[%s166 + $0x58] sm:$0xff]
      %v186 = vld [vmem:[%s166 + $0x60] sm:$0xff]
      %v187 = vld [vmem:[%s166 + $0x68] sm:$0xff]
      %v188 = vld [vmem:[%s166 + $0x70] sm:$0xff]
      %v189 = vld [vmem:[%s166 + $0x78] sm:$0xff]
      %v190 = vcvt.f32.s32.to.zero.pseudo %v174
      %v191 = vcvt.f32.s32.to.zero.pseudo %v175
      %v192 = vcvt.f32.s32.to.zero.pseudo %v176
      %v193 = vcvt.f32.s32.to.zero.pseudo %v177
      %v194 = vcvt.f32.s32.to.zero.pseudo %v178
      %v195 = vcvt.f32.s32.to.zero.pseudo %v179
      %v196 = vcvt.f32.s32.to.zero.pseudo %v180
      %v197 = vcvt.f32.s32.to.zero.pseudo %v181
      %v198 = vcvt.f32.s32.to.zero.pseudo %v182
      %v199 = vcvt.f32.s32.to.zero.pseudo %v183
      %v200 = vcvt.f32.s32.to.zero.pseudo %v184
      %v201 = vcvt.f32.s32.to.zero.pseudo %v185
      %v202 = vcvt.f32.s32.to.zero.pseudo %v186
      %v203 = vcvt.f32.s32.to.zero.pseudo %v187
      %v204 = vcvt.f32.s32.to.zero.pseudo %v188
      %v205 = vcvt.f32.s32.to.zero.pseudo %v189
      %vm206 = vcmp.gt.s32.totalorder %v190, 0
      %v207 = vsel %vm206, %v190, 0
      %vm208 = vcmp.gt.s32.totalorder %v191, 0
      %v209 = vsel %vm208, %v191, 0
      %vm210 = vcmp.gt.s32.totalorder %v192, 0
      %v211 = vsel %vm210, %v192, 0
      %vm212 = vcmp.gt.s32.totalorder %v193, 0
      %v213 = vsel %vm212, %v193, 0
      %vm214 = vcmp.gt.s32.totalorder %v194, 0
      %v215 = vsel %vm214, %v194, 0
      %vm216 = vcmp.gt.s32.totalorder %v195, 0
      %v217 = vsel %vm216, %v195, 0
      %vm218 = vcmp.gt.s32.totalorder %v196, 0
      %v219 = vsel %vm218, %v196, 0
      %vm220 = vcmp.gt.s32.totalorder %v197, 0
      %v221 = vsel %vm220, %v197, 0
      %vm222 = vcmp.gt.s32.totalorder %v198, 0
      %v223 = vsel %vm222, %v198, 0
      %vm224 = vcmp.gt.s32.totalorder %v199, 0
      %v225 = vsel %vm224, %v199, 0
      %vm226 = vcmp.gt.s32.totalorder %v200, 0
      %v227 = vsel %vm226, %v200, 0
      %vm228 = vcmp.gt.s32.totalorder %v201, 0
      %v229 = vsel %vm228, %v201, 0
      %vm230 = vcmp.gt.s32.totalorder %v202, 0
      %v231 = vsel %vm230, %v202, 0
      %vm232 = vcmp.gt.s32.totalorder %v203, 0
      %v233 = vsel %vm232, %v203, 0
      %vm234 = vcmp.gt.s32.totalorder %v204, 0
      %v235 = vsel %vm234, %v204, 0
      %vm236 = vcmp.gt.s32.totalorder %v205, 0
      %v237 = vsel %vm236, %v205, 0
      %vm238 = vcmp.lt.s32.totalorder %v207, 3
      %v239 = vsel %vm238, %v207, 3
      %vm240 = vcmp.lt.s32.totalorder %v209, 3
      %v241 = vsel %vm240, %v209, 3
      %vm242 = vcmp.lt.s32.totalorder %v211, 3
      %v243 = vsel %vm242, %v211, 3
      %vm244 = vcmp.lt.s32.totalorder %v213, 3
      %v245 = vsel %vm244, %v213, 3
      %vm246 = vcmp.lt.s32.totalorder %v215, 3
      %v247 = vsel %vm246, %v215, 3
      %vm248 = vcmp.lt.s32.totalorder %v217, 3
      %v249 = vsel %vm248, %v217, 3
      %vm250 = vcmp.lt.s32.totalorder %v219, 3
      %v251 = vsel %vm250, %v219, 3
      %vm252 = vcmp.lt.s32.totalorder %v221, 3
      %v253 = vsel %vm252, %v221, 3
      %vm254 = vcmp.lt.s32.totalorder %v223, 3
      %v255 = vsel %vm254, %v223, 3
      %vm256 = vcmp.lt.s32.totalorder %v225, 3
      %v257 = vsel %vm256, %v225, 3
      %vm258 = vcmp.lt.s32.totalorder %v227, 3
      %v259 = vsel %vm258, %v227, 3
      %vm260 = vcmp.lt.s32.totalorder %v229, 3
      %v261 = vsel %vm260, %v229, 3
      %vm262 = vcmp.lt.s32.totalorder %v231, 3
      %v263 = vsel %vm262, %v231, 3
      %vm264 = vcmp.lt.s32.totalorder %v233, 3
      %v265 = vsel %vm264, %v233, 3
      %vm266 = vcmp.lt.s32.totalorder %v235, 3
      %v267 = vsel %vm266, %v235, 3
      %vm268 = vcmp.lt.s32.totalorder %v237, 3
      %v269 = vsel %vm268, %v237, 3
      %v270 = vlaneseq
      %v271 = vand.u32 %v270, 127
      %vm272 = vcmp.eq.s32.totalorder %v271, 32
      %v273 = vsel %vm272, 1.0, %v174
      %v274 = vsel %vm272, 1.0, %v175
      %v275 = vsel %vm272, 1.0, %v176
      %v276 = vsel %vm272, 1.0, %v177
      %v277 = vsel %vm272, 1.0, %v178
      %v278 = vsel %vm272, 1.0, %v179
      %v279 = vsel %vm272, 1.0, %v180
      %v280 = vsel %vm272, 1.0, %v181
      %v281 = vsel %vm272, 1.0, %v182
      %v282 = vsel %vm272, 1.0, %v183
      %v283 = vsel %vm272, 1.0, %v184
      %v284 = vsel %vm272, 1.0, %v185
      %v285 = vsel %vm272, 1.0, %v186
      %v286 = vsel %vm272, 1.0, %v187
      %v287 = vsel %vm272, 1.0, %v188
      %v288 = vsel %vm272, 1.0, %v189
      %v289 = vld [vmem:[%s1] sm:$0xff]
      %v290 = vld [vmem:[%s1 + $0x8] sm:$0xff]
      %v291 = vld [vmem:[%s1 + $0x10] sm:$0xff]
      %v292 = vld [vmem:[%s1 + $0x18] sm:$0xff]
      %v293 = vld [vmem:[%s1 + $0x20] sm:$0x1]
      %vm294 = vcmask 269312
      %v296 = vsel %vm294, %v273, 0
      %v299 = vsel %vm294, %v274, 0
      %v302 = vsel %vm294, %v275, 0
      %v305 = vsel %vm294, %v276, 0
      %v308 = vsel %vm294, %v277, 0
      %v311 = vsel %vm294, %v278, 0
      %v314 = vsel %vm294, %v279, 0
      %v317 = vsel %vm294, %v280, 0
      %v320 = vsel %vm294, %v281, 0
      %v323 = vsel %vm294, %v282, 0
      %v326 = vsel %vm294, %v283, 0
      %v329 = vsel %vm294, %v284, 0
      %v332 = vsel %vm294, %v285, 0
      %v335 = vsel %vm294, %v286, 0
      %v338 = vsel %vm294, %v287, 0
      %v341 = vsel %vm294, %v288, 0
      %vm343 = vcmask 1040384
      %v345 = vsel %vm343, %v293, 0
      %347 = vmatprep.subr.mxu0 0.0
      %348 = vmatpush1.msra.mxu0 %v289
      %349 = vmatprep.subr.mxu0 0.0
      %350 = vmatpush1.msra.mxu0 %v290
      %351 = vmatprep.subr.mxu0 0.0
      %352 = vmatpush1.msra.mxu0 %v291
      %353 = vmatprep.subr.mxu0 0.0
      %354 = vmatpush1.msra.mxu0 %v292
      %355 = vmatprep.subr.mxu0 0.0
      %356 = vmatpush1.msra.mxu0 %v345
      %357 = vmatprep.subr.mxu0 0.0
      %358 = vmatpush1.msra.mxu0 0.0
      %359 = vmatprep.subr.mxu0 0.0
      %360 = vmatpush1.msra.mxu0 0.0
      %361 = vmatprep.subr.mxu0 0.0
      %362 = vmatpush1.msra.mxu0 0.0
      %363 = vmatprep.subr.mxu0 0.0
      %364 = vmatpush1.msra.mxu0 0.0
      %365 = vmatprep.subr.mxu0 0.0
      %366 = vmatpush1.msra.mxu0 0.0
      %367 = vmatprep.subr.mxu0 0.0
      %368 = vmatpush1.msra.mxu0 0.0
      %369 = vmatprep.subr.mxu0 0.0
      %370 = vmatpush1.msra.mxu0 0.0
      %371 = vmatprep.subr.mxu0 0.0
      %372 = vmatpush1.msra.mxu0 0.0
      %373 = vmatprep.subr.mxu0 0.0
      %374 = vmatpush1.msra.mxu0 0.0
      %375 = vmatprep.subr.mxu0 0.0
      %376 = vmatpush1.msra.mxu0 0.0
      %377 = vmatprep.subr.mxu0 0.0
      %378 = vmatpush1.msra.mxu0 0.0
      %379 = vmatprep.subr.mxu0 0.0
      %380 = vmatpush1.msra.mxu0 0.0
      %381 = vmatprep.subr.mxu0 0.0
      %382 = vmatpush1.msra.mxu0 0.0
      %383 = vmatprep.subr.mxu0 0.0
      %384 = vmatpush1.msra.mxu0 0.0
      %385 = vmatprep.subr.mxu0 0.0
      %386 = vmatpush1.msra.mxu0 0.0
      %387 = vmatprep.subr.mxu0 0.0
      %388 = vmatpush1.msra.mxu0 0.0
      %389 = vmatprep.subr.mxu0 0.0
      %390 = vmatpush1.msra.mxu0 0.0
      %391 = vmatprep.subr.mxu0 0.0
      %392 = vmatpush1.msra.mxu0 0.0
      %393 = vmatprep.subr.mxu0 0.0
      %394 = vmatpush1.msra.mxu0 0.0
      %395 = vmatprep.subr.mxu0 0.0
      %396 = vmatpush1.msra.mxu0 0.0
      %397 = vmatprep.subr.mxu0 0.0
      %398 = vmatpush1.msra.mxu0 0.0
      %399 = vmatprep.subr.mxu0 0.0
      %400 = vmatpush1.msra.mxu0 0.0
      %401 = vmatprep.subr.mxu0 0.0
      %402 = vmatpush1.msra.mxu0 0.0
      %403 = vmatprep.subr.mxu0 0.0
      %404 = vmatpush1.msra.mxu0 0.0
      %405 = vmatprep.subr.mxu0 0.0
      %406 = vmatpush1.msra.mxu0 0.0
      %407 = vmatprep.subr.mxu0 0.0
      %408 = vmatpush1.msra.mxu0 0.0
      %409 = vmatprep.subr.mxu0 0.0
      %410 = vmatpush1.msra.mxu0 0.0
      %411 = vmatprep.mubr.f32.mxu0 0.0
      %412 = vmatmul.mubr.f32.gmra.mrb[0].mxu0 %v296
      %v413 = vpop.f32.mrb[0].mxu0
      %v414 = vadd.f32 0.0, %v413
      %v415 = vpop.f32.mrb[0].mxu0
      %416 = vmatprep.mubr.f32.mxu0 0.0
      %417 = vmatmul.mubr.f32.gmra.mrb[0].mxu0 %v299
      %v418 = vpop.f32.mrb[0].mxu0
      %v419 = vadd.f32 0.0, %v418
      %v420 = vpop.f32.mrb[0].mxu0
      %421 = vmatprep.mubr.f32.mxu0 0.0
      %422 = vmatmul.mubr.f32.gmra.mrb[0].mxu0 %v302
      %v423 = vpop.f32.mrb[0].mxu0
      %v424 = vadd.f32 0.0, %v423
      %v425 = vpop.f32.mrb[0].mxu0
      %426 = vmatprep.mubr.f32.mxu0 0.0
      %427 = vmatmul.mubr.f32.gmra.mrb[0].mxu0 %v305
      %v428 = vpop.f32.mrb[0].mxu0
      %v429 = vadd.f32 0.0, %v428
      %v430 = vpop.f32.mrb[0].mxu0
      %431 = vmatprep.mubr.f32.mxu0 0.0
      %432 = vmatmul.mubr.f32.gmra.mrb[0].mxu0 %v308
      %v433 = vpop.f32.mrb[0].mxu0
      %v434 = vadd.f32 0.0, %v433
      %v435 = vpop.f32.mrb[0].mxu0
      %436 = vmatprep.mubr.f32.mxu0 0.0
      %437 = vmatmul.mubr.f32.gmra.mrb[0].mxu0 %v311
      %v438 = vpop.f32.mrb[0].mxu0
      %v439 = vadd.f32 0.0, %v438
      %v440 = vpop.f32.mrb[0].mxu0
      %441 = vmatprep.mubr.f32.mxu0 0.0
      %442 = vmatmul.mubr.f32.gmra.mrb[0].mxu0 %v314
      %v443 = vpop.f32.mrb[0].mxu0
      %v444 = vadd.f32 0.0, %v443
      %v445 = vpop.f32.mrb[0].mxu0
      %446 = vmatprep.mubr.f32.mxu0 0.0
      %447 = vmatmul.mubr.f32.gmra.mrb[0].mxu0 %v317
      %v448 = vpop.f32.mrb[0].mxu0
      %v449 = vadd.f32 0.0, %v448
      %v450 = vpop.f32.mrb[0].mxu0
      %451 = vmatprep.mubr.f32.mxu0 0.0
      %452 = vmatmul.mubr.f32.gmra.mrb[0].mxu0 %v320
      %v453 = vpop.f32.mrb[0].mxu0
      %v454 = vadd.f32 0.0, %v453
      %v455 = vpop.f32.mrb[0].mxu0
      %456 = vmatprep.mubr.f32.mxu0 0.0
      %457 = vmatmul.mubr.f32.gmra.mrb[0].mxu0 %v323
      %v458 = vpop.f32.mrb[0].mxu0
      %v459 = vadd.f32 0.0, %v458
      %v460 = vpop.f32.mrb[0].mxu0
      %461 = vmatprep.mubr.f32.mxu0 0.0
      %462 = vmatmul.mubr.f32.gmra.mrb[0].mxu0 %v326
      %v463 = vpop.f32.mrb[0].mxu0
      %v464 = vadd.f32 0.0, %v463
      %v465 = vpop.f32.mrb[0].mxu0
      %466 = vmatprep.mubr.f32.mxu0 0.0
      %467 = vmatmul.mubr.f32.gmra.mrb[0].mxu0 %v329
      %v468 = vpop.f32.mrb[0].mxu0
      %v469 = vadd.f32 0.0, %v468
      %v470 = vpop.f32.mrb[0].mxu0
      %471 = vmatprep.mubr.f32.mxu0 0.0
      %472 = vmatmul.mubr.f32.gmra.mrb[0].mxu0 %v332
      %v473 = vpop.f32.mrb[0].mxu0
      %v474 = vadd.f32 0.0, %v473
      %v475 = vpop.f32.mrb[0].mxu0
      %476 = vmatprep.mubr.f32.mxu0 0.0
      %477 = vmatmul.mubr.f32.gmra.mrb[0].mxu0 %v335
      %v478 = vpop.f32.mrb[0].mxu0
      %v479 = vadd.f32 0.0, %v478
      %v480 = vpop.f32.mrb[0].mxu0
      %481 = vmatprep.mubr.f32.mxu0 0.0
      %482 = vmatmul.mubr.f32.gmra.mrb[0].mxu0 %v338
      %v483 = vpop.f32.mrb[0].mxu0
      %v484 = vadd.f32 0.0, %v483
      %v485 = vpop.f32.mrb[0].mxu0
      %486 = vmatprep.mubr.f32.mxu0 0.0
      %487 = vmatmul.mubr.f32.gmra.mrb[0].mxu0 %v341
      %v488 = vpop.f32.mrb[0].mxu0
      %v489 = vadd.f32 0.0, %v488
      %v490 = vpop.f32.mrb[0].mxu0
      %491 = vdwg.mxu0
      %v492 = vmax.f32 %v414, 0.0
      %v493 = vmax.f32 %v419, 0.0
      %v494 = vmax.f32 %v424, 0.0
      %v495 = vmax.f32 %v429, 0.0
      %v496 = vmax.f32 %v434, 0.0
      %v497 = vmax.f32 %v439, 0.0
      %v498 = vmax.f32 %v444, 0.0
      %v499 = vmax.f32 %v449, 0.0
      %v500 = vmax.f32 %v454, 0.0
      %v501 = vmax.f32 %v459, 0.0
      %v502 = vmax.f32 %v464, 0.0
      %v503 = vmax.f32 %v469, 0.0
      %v504 = vmax.f32 %v474, 0.0
      %v505 = vmax.f32 %v479, 0.0
      %v506 = vmax.f32 %v484, 0.0
      %v507 = vmax.f32 %v489, 0.0
      %v508 = vld [vmem:[%s2] sm:$0xff]
      %v509 = vld [vmem:[%s2 + $0x8] sm:$0xff]
      %v510 = vld [vmem:[%s2 + $0x10] sm:$0xff]
      %v511 = vld [vmem:[%s2 + $0x18] sm:$0xff]
      %v512 = vld [vmem:[%s2 + $0x20] sm:$0x3]
      %v513 = vld [vmem:[%s2 + $0x22] sm:$0x1]
      %v514 = vlaneseq
      %v515 = vshrl.u32 %v514, 7
      %v516 = vsub.s32 0, %v515
      %v517 = vrot.slane %v513, %v516
      %vm518 = vcmask 277504
      %v520 = vsel %vm518, %v492, 0
      %v523 = vsel %vm518, %v493, 0
      %v526 = vsel %vm518, %v494, 0
      %v529 = vsel %vm518, %v495, 0
      %v532 = vsel %vm518, %v496, 0
      %v535 = vsel %vm518, %v497, 0
      %v538 = vsel %vm518, %v498, 0
      %v541 = vsel %vm518, %v499, 0
      %v544 = vsel %vm518, %v500, 0
      %v547 = vsel %vm518, %v501, 0
      %v550 = vsel %vm518, %v502, 0
      %v553 = vsel %vm518, %v503, 0
      %v556 = vsel %vm518, %v504, 0
      %v559 = vsel %vm518, %v505, 0
      %v562 = vsel %vm518, %v506, 0
      %v565 = vsel %vm518, %v507, 0
      %vm567 = vcmask 1041408
      %v569 = vsel %vm567, %v512, 0
      %571 = vmatprep.subr.mxu0 0.0
      %572 = vmatpush1.msra.mxu0 %v508
      %573 = vmatprep.subr.mxu0 0.0
      %574 = vmatpush1.msra.mxu0 %v509
      %575 = vmatprep.subr.mxu0 0.0
      %576 = vmatpush1.msra.mxu0 %v510
      %577 = vmatprep.subr.mxu0 0.0
      %578 = vmatpush1.msra.mxu0 %v511
      %579 = vmatprep.subr.mxu0 0.0
      %580 = vmatpush1.msra.mxu0 %v569
      %581 = vmatprep.subr.mxu0 0.0
      %582 = vmatpush1.msra.mxu0 0.0
      %583 = vmatprep.subr.mxu0 0.0
      %584 = vmatpush1.msra.mxu0 0.0
      %585 = vmatprep.subr.mxu0 0.0
      %586 = vmatpush1.msra.mxu0 0.0
      %587 = vmatprep.subr.mxu0 0.0
      %588 = vmatpush1.msra.mxu0 0.0
      %589 = vmatprep.subr.mxu0 0.0
      %590 = vmatpush1.msra.mxu0 0.0
      %591 = vmatprep.subr.mxu0 0.0
      %592 = vmatpush1.msra.mxu0 0.0
      %593 = vmatprep.subr.mxu0 0.0
      %594 = vmatpush1.msra.mxu0 0.0
      %595 = vmatprep.subr.mxu0 0.0
      %596 = vmatpush1.msra.mxu0 0.0
      %597 = vmatprep.subr.mxu0 0.0
      %598 = vmatpush1.msra.mxu0 0.0
      %599 = vmatprep.subr.mxu0 0.0
      %600 = vmatpush1.msra.mxu0 0.0
      %601 = vmatprep.subr.mxu0 0.0
      %602 = vmatpush1.msra.mxu0 0.0
      %603 = vmatprep.subr.mxu0 0.0
      %604 = vmatpush1.msra.mxu0 0.0
      %605 = vmatprep.subr.mxu0 0.0
      %606 = vmatpush1.msra.mxu0 0.0
      %607 = vmatprep.subr.mxu0 0.0
      %608 = vmatpush1.msra.mxu0 0.0
      %609 = vmatprep.subr.mxu0 0.0
      %610 = vmatpush1.msra.mxu0 0.0
      %611 = vmatprep.subr.mxu0 0.0
      %612 = vmatpush1.msra.mxu0 0.0
      %613 = vmatprep.subr.mxu0 0.0
      %614 = vmatpush1.msra.mxu0 0.0
      %615 = vmatprep.subr.mxu0 0.0
      %616 = vmatpush1.msra.mxu0 0.0
      %617 = vmatprep.subr.mxu0 0.0
      %618 = vmatpush1.msra.mxu0 0.0
      %619 = vmatprep.subr.mxu0 0.0
      %620 = vmatpush1.msra.mxu0 0.0
      %621 = vmatprep.subr.mxu0 0.0
      %622 = vmatpush1.msra.mxu0 0.0
      %623 = vmatprep.subr.mxu0 0.0
      %624 = vmatpush1.msra.mxu0 0.0
      %625 = vmatprep.subr.mxu0 0.0
      %626 = vmatpush1.msra.mxu0 0.0
      %627 = vmatprep.subr.mxu0 0.0
      %628 = vmatpush1.msra.mxu0 0.0
      %629 = vmatprep.subr.mxu0 0.0
      %630 = vmatpush1.msra.mxu0 0.0
      %631 = vmatprep.subr.mxu0 0.0
      %632 = vmatpush1.msra.mxu0 0.0
      %633 = vmatprep.subr.mxu0 0.0
      %634 = vmatpush1.msra.mxu0 0.0
      %635 = vmatprep.mubr.f32.mxu0 0.0
      %636 = vmatmul.mubr.f32.gmra.mrb[0].mxu0 %v520
      %v637 = vpop.f32.mrb[0].mxu0
      %v638 = vadd.f32 %v517, %v637
      %v639 = vpop.f32.mrb[0].mxu0
      %640 = vmatprep.mubr.f32.mxu0 0.0
      %641 = vmatmul.mubr.f32.gmra.mrb[0].mxu0 %v523
      %v642 = vpop.f32.mrb[0].mxu0
      %v643 = vadd.f32 %v517, %v642
      %v644 = vpop.f32.mrb[0].mxu0
      %645 = vmatprep.mubr.f32.mxu0 0.0
      %646 = vmatmul.mubr.f32.gmra.mrb[0].mxu0 %v526
      %v647 = vpop.f32.mrb[0].mxu0
      %v648 = vadd.f32 %v517, %v647
      %v649 = vpop.f32.mrb[0].mxu0
      %650 = vmatprep.mubr.f32.mxu0 0.0
      %651 = vmatmul.mubr.f32.gmra.mrb[0].mxu0 %v529
      %v652 = vpop.f32.mrb[0].mxu0
      %v653 = vadd.f32 %v517, %v652
      %v654 = vpop.f32.mrb[0].mxu0
      %655 = vmatprep.mubr.f32.mxu0 0.0
      %656 = vmatmul.mubr.f32.gmra.mrb[0].mxu0 %v532
      %v657 = vpop.f32.mrb[0].mxu0
      %v658 = vadd.f32 %v517, %v657
      %v659 = vpop.f32.mrb[0].mxu0
      %660 = vmatprep.mubr.f32.mxu0 0.0
      %661 = vmatmul.mubr.f32.gmra.mrb[0].mxu0 %v535
      %v662 = vpop.f32.mrb[0].mxu0
      %v663 = vadd.f32 %v517, %v662
      %v664 = vpop.f32.mrb[0].mxu0
      %665 = vmatprep.mubr.f32.mxu0 0.0
      %666 = vmatmul.mubr.f32.gmra.mrb[0].mxu0 %v538
      %v667 = vpop.f32.mrb[0].mxu0
      %v668 = vadd.f32 %v517, %v667
      %v669 = vpop.f32.mrb[0].mxu0
      %670 = vmatprep.mubr.f32.mxu0 0.0
      %671 = vmatmul.mubr.f32.gmra.mrb[0].mxu0 %v541
      %v672 = vpop.f32.mrb[0].mxu0
      %v673 = vadd.f32 %v517, %v672
      %v674 = vpop.f32.mrb[0].mxu0
      %675 = vmatprep.mubr.f32.mxu0 0.0
      %676 = vmatmul.mubr.f32.gmra.mrb[0].mxu0 %v544
      %v677 = vpop.f32.mrb[0].mxu0
      %v678 = vadd.f32 %v517, %v677
      %v679 = vpop.f32.mrb[0].mxu0
      %680 = vmatprep.mubr.f32.mxu0 0.0
      %681 = vmatmul.mubr.f32.gmra.mrb[0].mxu0 %v547
      %v682 = vpop.f32.mrb[0].mxu0
      %v683 = vadd.f32 %v517, %v682
      %v684 = vpop.f32.mrb[0].mxu0
      %685 = vmatprep.mubr.f32.mxu0 0.0
      %686 = vmatmul.mubr.f32.gmra.mrb[0].mxu0 %v550
      %v687 = vpop.f32.mrb[0].mxu0
      %v688 = vadd.f32 %v517, %v687
      %v689 = vpop.f32.mrb[0].mxu0
      %690 = vmatprep.mubr.f32.mxu0 0.0
      %691 = vmatmul.mubr.f32.gmra.mrb[0].mxu0 %v553
      %v692 = vpop.f32.mrb[0].mxu0
      %v693 = vadd.f32 %v517, %v692
      %v694 = vpop.f32.mrb[0].mxu0
      %695 = vmatprep.mubr.f32.mxu0 0.0
      %696 = vmatmul.mubr.f32.gmra.mrb[0].mxu0 %v556
      %v697 = vpop.f32.mrb[0].mxu0
      %v698 = vadd.f32 %v517, %v697
      %v699 = vpop.f32.mrb[0].mxu0
      %700 = vmatprep.mubr.f32.mxu0 0.0
      %701 = vmatmul.mubr.f32.gmra.mrb[0].mxu0 %v559
      %v702 = vpop.f32.mrb[0].mxu0
      %v703 = vadd.f32 %v517, %v702
      %v704 = vpop.f32.mrb[0].mxu0
      %705 = vmatprep.mubr.f32.mxu0 0.0
      %706 = vmatmul.mubr.f32.gmra.mrb[0].mxu0 %v562
      %v707 = vpop.f32.mrb[0].mxu0
      %v708 = vadd.f32 %v517, %v707
      %v709 = vpop.f32.mrb[0].mxu0
      %710 = vmatprep.mubr.f32.mxu0 0.0
      %711 = vmatmul.mubr.f32.gmra.mrb[0].mxu0 %v565
      %v712 = vpop.f32.mrb[0].mxu0
      %v713 = vadd.f32 %v517, %v712
      %v714 = vpop.f32.mrb[0].mxu0
      %715 = vdwg.mxu0
      %716 = vset.pattern.permute.xlu0 32
      %717 = vperm.xlu0 %716, %v239
      %v718 = vpop.permute.xlu0 %717
      %719 = vset.pattern.permute.xlu0 32
      %720 = vperm.xlu0 %719, %v241
      %v721 = vpop.permute.xlu0 %720
      %722 = vset.pattern.permute.xlu0 32
      %723 = vperm.xlu0 %722, %v243
      %v724 = vpop.permute.xlu0 %723
      %725 = vset.pattern.permute.xlu0 32
      %726 = vperm.xlu0 %725, %v245
      %v727 = vpop.permute.xlu0 %726
      %728 = vset.pattern.permute.xlu0 32
      %729 = vperm.xlu0 %728, %v247
      %v730 = vpop.permute.xlu0 %729
      %731 = vset.pattern.permute.xlu0 32
      %732 = vperm.xlu0 %731, %v249
      %v733 = vpop.permute.xlu0 %732
      %734 = vset.pattern.permute.xlu0 32
      %735 = vperm.xlu0 %734, %v251
      %v736 = vpop.permute.xlu0 %735
      %737 = vset.pattern.permute.xlu0 32
      %738 = vperm.xlu0 %737, %v253
      %v739 = vpop.permute.xlu0 %738
      %740 = vset.pattern.permute.xlu0 32
      %741 = vperm.xlu0 %740, %v255
      %v742 = vpop.permute.xlu0 %741
      %743 = vset.pattern.permute.xlu0 32
      %744 = vperm.xlu0 %743, %v257
      %v745 = vpop.permute.xlu0 %744
      %746 = vset.pattern.permute.xlu0 32
      %747 = vperm.xlu0 %746, %v259
      %v748 = vpop.permute.xlu0 %747
      %749 = vset.pattern.permute.xlu0 32
      %750 = vperm.xlu0 %749, %v261
      %v751 = vpop.permute.xlu0 %750
      %752 = vset.pattern.permute.xlu0 32
      %753 = vperm.xlu0 %752, %v263
      %v754 = vpop.permute.xlu0 %753
      %755 = vset.pattern.permute.xlu0 32
      %756 = vperm.xlu0 %755, %v265
      %v757 = vpop.permute.xlu0 %756
      %758 = vset.pattern.permute.xlu0 32
      %759 = vperm.xlu0 %758, %v267
      %v760 = vpop.permute.xlu0 %759
      %761 = vset.pattern.permute.xlu0 32
      %762 = vperm.xlu0 %761, %v269
      %v763 = vpop.permute.xlu0 %762
      %vm764 = vcmp.eq.s32.totalorder %v271, %v718
      %vm765 = vcmp.eq.s32.totalorder %v271, %v721
      %vm766 = vcmp.eq.s32.totalorder %v271, %v724
      %vm767 = vcmp.eq.s32.totalorder %v271, %v727
      %vm768 = vcmp.eq.s32.totalorder %v271, %v730
      %vm769 = vcmp.eq.s32.totalorder %v271, %v733
      %vm770 = vcmp.eq.s32.totalorder %v271, %v736
      %vm771 = vcmp.eq.s32.totalorder %v271, %v739
      %vm772 = vcmp.eq.s32.totalorder %v271, %v742
      %vm773 = vcmp.eq.s32.totalorder %v271, %v745
      %vm774 = vcmp.eq.s32.totalorder %v271, %v748
      %vm775 = vcmp.eq.s32.totalorder %v271, %v751
      %vm776 = vcmp.eq.s32.totalorder %v271, %v754
      %vm777 = vcmp.eq.s32.totalorder %v271, %v757
      %vm778 = vcmp.eq.s32.totalorder %v271, %v760
      %vm779 = vcmp.eq.s32.totalorder %v271, %v763
      %v780 = vsel %vm764, %v638, 0.0
      %v781 = vsel %vm765, %v643, 0.0
      %v782 = vsel %vm766, %v648, 0.0
      %v783 = vsel %vm767, %v653, 0.0
      %v784 = vsel %vm768, %v658, 0.0
      %v785 = vsel %vm769, %v663, 0.0
      %v786 = vsel %vm770, %v668, 0.0
      %v787 = vsel %vm771, %v673, 0.0
      %v788 = vsel %vm772, %v678, 0.0
      %v789 = vsel %vm773, %v683, 0.0
      %v790 = vsel %vm774, %v688, 0.0
      %v791 = vsel %vm775, %v693, 0.0
      %v792 = vsel %vm776, %v698, 0.0
      %v793 = vsel %vm777, %v703, 0.0
      %v794 = vsel %vm778, %v708, 0.0
      %v795 = vsel %vm779, %v713, 0.0
      %vm796 = vcmask 31744
      %v797 = vsel %vm796, %v780, 0.0
      %798 = vadd.xlane.f32.xlu0 %v797
      %v799 = vpop.xlane.xlu0 %798
      %v800 = vsel %vm796, %v781, 0.0
      %801 = vadd.xlane.f32.xlu0 %v800
      %v802 = vpop.xlane.xlu0 %801
      %v803 = vsel %vm796, %v782, 0.0
      %804 = vadd.xlane.f32.xlu0 %v803
      %v805 = vpop.xlane.xlu0 %804
      %v806 = vsel %vm796, %v783, 0.0
      %807 = vadd.xlane.f32.xlu0 %v806
      %v808 = vpop.xlane.xlu0 %807
      %v809 = vsel %vm796, %v784, 0.0
      %810 = vadd.xlane.f32.xlu0 %v809
      %v811 = vpop.xlane.xlu0 %810
      %v812 = vsel %vm796, %v785, 0.0
      %813 = vadd.xlane.f32.xlu0 %v812
      %v814 = vpop.xlane.xlu0 %813
      %v815 = vsel %vm796, %v786, 0.0
      %816 = vadd.xlane.f32.xlu0 %v815
      %v817 = vpop.xlane.xlu0 %816
      %v818 = vsel %vm796, %v787, 0.0
      %819 = vadd.xlane.f32.xlu0 %v818
      %v820 = vpop.xlane.xlu0 %819
      %v821 = vsel %vm796, %v788, 0.0
      %822 = vadd.xlane.f32.xlu0 %v821
      %v823 = vpop.xlane.xlu0 %822
      %v824 = vsel %vm796, %v789, 0.0
      %825 = vadd.xlane.f32.xlu0 %v824
      %v826 = vpop.xlane.xlu0 %825
      %v827 = vsel %vm796, %v790, 0.0
      %828 = vadd.xlane.f32.xlu0 %v827
      %v829 = vpop.xlane.xlu0 %828
      %v830 = vsel %vm796, %v791, 0.0
      %831 = vadd.xlane.f32.xlu0 %v830
      %v832 = vpop.xlane.xlu0 %831
      %v833 = vsel %vm796, %v792, 0.0
      %834 = vadd.xlane.f32.xlu0 %v833
      %v835 = vpop.xlane.xlu0 %834
      %v836 = vsel %vm796, %v793, 0.0
      %837 = vadd.xlane.f32.xlu0 %v836
      %v838 = vpop.xlane.xlu0 %837
      %v839 = vsel %vm796, %v794, 0.0
      %840 = vadd.xlane.f32.xlu0 %v839
      %v841 = vpop.xlane.xlu0 %840
      %v842 = vsel %vm796, %v795, 0.0
      %843 = vadd.xlane.f32.xlu0 %v842
      %v844 = vpop.xlane.xlu0 %843
      %vm845 = vcmask 7168
      %846 = vst.msk [vmem:[%s172] sm:$0xff] %vm845, %v799
      %847 = vst.msk [vmem:[%s172 + $0x8] sm:$0xff] %vm845, %v802
      %848 = vst.msk [vmem:[%s172 + $0x10] sm:$0xff] %vm845, %v805
      %849 = vst.msk [vmem:[%s172 + $0x18] sm:$0xff] %vm845, %v808
      %850 = vst.msk [vmem:[%s172 + $0x20] sm:$0xff] %vm845, %v811
      %851 = vst.msk [vmem:[%s172 + $0x28] sm:$0xff] %vm845, %v814
      %852 = vst.msk [vmem:[%s172 + $0x30] sm:$0xff] %vm845, %v817
      %853 = vst.msk [vmem:[%s172 + $0x38] sm:$0xff] %vm845, %v820
      %854 = vst.msk [vmem:[%s172 + $0x40] sm:$0xff] %vm845, %v823
      %855 = vst.msk [vmem:[%s172 + $0x48] sm:$0xff] %vm845, %v826
      %856 = vst.msk [vmem:[%s172 + $0x50] sm:$0xff] %vm845, %v829
      %857 = vst.msk [vmem:[%s172 + $0x58] sm:$0xff] %vm845, %v832
      %858 = vst.msk [vmem:[%s172 + $0x60] sm:$0xff] %vm845, %v835
      %859 = vst.msk [vmem:[%s172 + $0x68] sm:$0xff] %vm845, %v838
      %860 = vst.msk [vmem:[%s172 + $0x70] sm:$0xff] %vm845, %v841
      %861 = vst.msk [vmem:[%s172 + $0x78] sm:$0xff] %vm845, %v844
      %s862 = smul.u32 16, %s14
      %p863 = scmp.lt.s32.totalorder %s862, 31
      %s864 = scalar_select %p863, %s862, 31
      %s865 = smul.addr %s864, 8
      %s866 = scalar_lea.vmem %s3, %s865
      // Predicated region
      $region33: #{critic_forward.1} parent=31 // pred_check
        %p867 = pneg %p100
      $region34: #{critic_forward.1} parent=31 // pred_check_branch
        %869 = sbr.rel (%p867) target = $region36
      $region35: #{critic_forward.1} parent=31 // pred_region
        %s870 = smul.u32 16, %s14
      $region36: #{critic_forward.1} parent=31 // pred_fallthru
        _
    $region32: #{critic_forward.1} parent=5 // pred_fallthru
      _
    %p871 = scmp.le.s32.totalorder 2, %s9
    // Predicated region
    $region37: #{critic_forward.1} parent=5 // pred_check
      %p872 = pneg %p871
    $region38: #{critic_forward.1} parent=5 // pred_check_branch
      %874 = sbr.rel (%p872) target = $region40
    $region39: #{critic_forward.1} parent=5 // pred_region
      %s875 = ssub.s32 %s9, 2
      // Predicated region
      $region41: #{critic_forward.1} parent=39 // pred_check
        %p876 = pneg %p106
      $region42: #{critic_forward.1} parent=39 // pred_check_branch
        %878 = sbr.rel (%p876) target = $region44
      $region43: #{critic_forward.1} parent=39 // pred_region
        %s879 = smul.u32 16, %s15
        %p880 = scmp.lt.s32.totalorder %s879, 31
        %s881 = scalar_select %p880, %s879, 31
        %s882 = smul.addr %s881, 8
        %s883 = scalar_lea.vmem %s3, %s882
      $region44: #{critic_forward.1} parent=39 // pred_fallthru
        _
    $region40: #{critic_forward.1} parent=5 // pred_fallthru
      _
  $region6: #{critic_forward.1} parent=0 // loop_footer
    %s13 = sadd.s32 1, %s9
  $region7: #{critic_forward.1} parent=0 // loop_footer_branch
    %8 = sbr.rel target = $region3
  $region8: #{critic_forward.1} parent=0 // loop_exit
    _

</llo_original>
